<compile_context>
chip_gen: v7x
topology: tpu7x:2x2x1
jax: 0.10.0
libtpu: 0.0.40
codegen_flags: <defaults>
</compile_context>

<pallas_src>
import functools

import jax
import jax.numpy as jnp
from jax.experimental import pallas as pl
from jax.experimental.pallas import tpu as pltpu

LANE = 128
SUBLANE = 8


def _round_up(n: int, m: int) -> int:
    return ((n + m - 1) // m) * m


def _pad2(a, rows, cols):
    return jnp.pad(a, ((0, rows - a.shape[0]), (0, cols - a.shape[1])))


def mlp_kernel(x_ref, w1_ref, b1_ref, w2_ref, b2_ref, w3_ref, b3_ref, o_ref):
    # Layer 1: (tb, in_dim) @ (in_dim, 128) on the MXU (short K is masked by Mosaic),
    # bias + ReLU on the VPU.
    h1 = jnp.dot(x_ref[...], w1_ref[...], preferred_element_type=jnp.float32)
    h1 = jnp.maximum(h1 + b1_ref[...], 0.0)

    # Layer 2: (tb, 128) @ (128, 128) — one clean MXU tile per 128 batch rows.
    h2 = jnp.dot(h1, w2_ref[...], preferred_element_type=jnp.float32)
    h2 = jnp.maximum(h2 + b2_ref[...], 0.0)

    # Layer 3 (hidden -> 1): contract the w3 row (1, H) against h2 (tb, H) on H
    # (NT dot_general), producing a lane-dense (1, tb) row where lane i holds the
    # result for batch row i of this tile.  No transpose/relayout needed.
    out_row = jax.lax.dot_general(
        w3_ref[...], h2,
        dimension_numbers=(((1,), (1,)), ((), ())),
        preferred_element_type=jnp.float32,
    )  # (1, tb)
    out_row = out_row + b3_ref[0]  # scalar bias from SMEM

    # Lane-dense packed store: (1, 1, tb) block, no redundancy.
    o_ref[...] = out_row.reshape(o_ref.shape).astype(o_ref.dtype)


def prepare_params(params):
    """One-time padding/relayout of weights (hoisted out of the forward path).

    Hidden dim is zero-padded to 128 lanes so both hidden matmuls are clean MXU
    tiles; the input dim is left unpadded (the kernel contracts over K=input_dim).
    """
    w1, b1 = params["w1"], params["b1"]
    w2, b2 = params["w2"], params["b2"]
    w3, b3 = params["w3"], params["b3"]
    input_dim, hidden_dim = w1.shape
    hid_p = _round_up(hidden_dim, LANE)  # 50 -> 128
    return {
        "w1": _pad2(w1, input_dim, hid_p),            # (in_dim, 128)
        "b1": _pad2(b1.reshape(1, -1), 1, hid_p),     # (1, 128)
        "w2": _pad2(w2, hid_p, hid_p),                # (128, 128)
        "b2": _pad2(b2.reshape(1, -1), 1, hid_p),     # (1, 128)
        "w3": _pad2(w3.T, 1, hid_p),                  # (1, 128) row for the NT dot
        "b3": b3.reshape(-1)[:1],                     # (1,) scalar -> SMEM
    }


@functools.partial(jax.jit, static_argnames=("tb",))
def simple_test_model_forward(x, prepared, *, tb=None):
    """x: (B, input_dim) f32. prepared: output of prepare_params (padded weights)."""
    w1, b1, w2, b2, w3r, b3 = (prepared["w1"], prepared["b1"], prepared["w2"],
                               prepared["b2"], prepared["w3"], prepared["b3"])
    B, input_dim = x.shape
    assert w1.shape[0] == input_dim
    hid_p = w1.shape[1]

    # Batch tiling: pad B to a sublane multiple, pick a (large) tile, keep the grid exact.
    b_pad = _round_up(B, SUBLANE)
    tb_eff = 2048 if tb is None else tb
    tb_eff = max(SUBLANE, _round_up(min(tb_eff, b_pad), SUBLANE))
    # Guarantee >= 2 grid steps when the batch allows it, so the "parallel" batch axis
    # can shard across both TensorCores on v7x (negligible cost on single-TC chips).
    if tb_eff >= b_pad and b_pad >= 2 * SUBLANE:
        tb_eff = _round_up((b_pad + 1) // 2, SUBLANE)
    b_pad = _round_up(b_pad, tb_eff)
    grid_n = b_pad // tb_eff

    # Only the batch dim of x is padded (zero rows, sliced off at the end).
    x_p = jnp.pad(x, ((0, b_pad - B), (0, 0)))

    out3 = pl.pallas_call(
        mlp_kernel,
        out_shape=jax.ShapeDtypeStruct((grid_n, 1, tb_eff), jnp.float32),
        grid=(grid_n,),
        in_specs=[
            # x tile: (tb, input_dim); last dim equals the full array dim (legal),
            # pipelined/double-buffered across the batch grid.
            pl.BlockSpec((tb_eff, input_dim), lambda i: (i, 0)),
            # Weights / biases: constant index maps -> stay resident in VMEM.
            pl.BlockSpec((input_dim, hid_p), lambda i: (0, 0)),
            pl.BlockSpec((1, hid_p), lambda i: (0, 0)),
            pl.BlockSpec((hid_p, hid_p), lambda i: (0, 0)),
            pl.BlockSpec((1, hid_p), lambda i: (0, 0)),
            pl.BlockSpec((1, hid_p), lambda i: (0, 0)),
            # b3: scalar in SMEM (no VMEM tile padding, no vector-side load).
            pl.BlockSpec(memory_space=pltpu.MemorySpace.SMEM),
        ],
        # Lane-dense packed output: one (1, 1, tb) row per batch tile.
        out_specs=pl.BlockSpec((1, 1, tb_eff), lambda i: (i, 0, 0)),
        compiler_params=pltpu.CompilerParams(
            dimension_semantics=("parallel",),   # megacore sharding on v7x
        ),
    )(x_p, w1, b1, w2, b2, w3r, b3)

    # (grid_n, 1, tb) -> (b_pad,) -> (B, 1); row-major flatten keeps batch order.
    return out3.reshape(-1)[:B].reshape(B, 1)


def init_params(key, input_dim=10, hidden_dim=50, output_dim=1):
    """Deterministic init mimicking PyTorch nn.Linear default (U[-1/sqrt(fan_in), +])."""
    ks = jax.random.split(key, 6)

    def linear_init(kw, kb, fan_in, fan_out):
        bound = 1.0 / jnp.sqrt(jnp.float32(fan_in))
        w = jax.random.uniform(kw, (fan_in, fan_out), jnp.float32, -bound, bound)
        b = jax.random.uniform(kb, (1, fan_out), jnp.float32, -bound, bound)
        return w, b

    w1, b1 = linear_init(ks[0], ks[1], input_dim, hidden_dim)
    w2, b2 = linear_init(ks[2], ks[3], hidden_dim, hidden_dim)
    w3, b3 = linear_init(ks[4], ks[5], hidden_dim, output_dim)
    return {"w1": w1, "b1": b1, "w2": w2, "b2": b2, "w3": w3, "b3": b3}


def reference_forward(x, p):
    h1 = jnp.maximum(x @ p["w1"] + p["b1"], 0.0)
    h2 = jnp.maximum(h1 @ p["w2"] + p["b2"], 0.0)
    return h2 @ p["w3"] + p["b3"]


if __name__ == "__main__":
    key = jax.random.PRNGKey(0)
    k_x, k_p, k_x2 = jax.random.split(key, 3)

    batch, input_dim, hidden_dim, output_dim = 8, 10, 50, 1
    x = jax.random.normal(k_x, (batch, input_dim), jnp.float32)
    params = init_params(k_p, input_dim, hidden_dim, output_dim)
    prepared = prepare_params(params)   # one-time weight padding, outside the hot path

    # Tolerances absorb MXU default-precision (bf16-pass) vs XLA f32 dot differences;
    # any structural bug would produce O(0.1-1) errors on these magnitudes.
    ATOL = RTOL = 1e-2

    # Small-batch check (single grid step, full-array blocks).
    out = jax.block_until_ready(simple_test_model_forward(x, prepared))
    ref = reference_forward(x, params)
    assert out.shape == (batch, output_dim)
    assert jnp.allclose(out, ref, atol=ATOL, rtol=RTOL), "Pallas output mismatch vs reference"

    # Larger-batch check exercising the pipelined, parallel batch grid and the
    # lane-dense packed output (3 steps with tb=128, padded batch rows sliced off).
    x2 = jax.random.normal(k_x2, (300, input_dim), jnp.float32)
    out2 = jax.block_until_ready(simple_test_model_forward(x2, prepared, tb=128))
    ref2 = reference_forward(x2, params)
    assert out2.shape == (300, output_dim)
    assert jnp.allclose(out2, ref2, atol=ATOL, rtol=RTOL), "Pallas output mismatch vs reference (batched)"

    # Default tile path (>=2 grid steps guaranteed: tb=152, grid=(2,)).
    out3 = jax.block_until_ready(simple_test_model_forward(x2, prepared))
    assert out3.shape == (300, output_dim)
    assert jnp.allclose(out3, ref2, atol=ATOL, rtol=RTOL), "Pallas output mismatch vs reference (default tile)"

    print("KERNEL_OK")
</pallas_src>

<mosaic_0001>
module attributes {stable_mosaic.version = 11 : i64} {
  func.func @mlp_kernel(%arg0: i32, %arg1: memref<8x10xf32, #tpu.memory_space<vmem>>, %arg2: memref<10x128xf32, #tpu.memory_space<vmem>>, %arg3: memref<1x128xf32, #tpu.memory_space<vmem>>, %arg4: memref<128x128xf32, #tpu.memory_space<vmem>>, %arg5: memref<1x128xf32, #tpu.memory_space<vmem>>, %arg6: memref<1x128xf32, #tpu.memory_space<vmem>>, %arg7: memref<1xf32, #tpu.memory_space<smem>>, %arg8: memref<1x1x8xf32, #tpu.memory_space<vmem>>) attributes {dimension_semantics = [#tpu.dimension_semantics<parallel>], iteration_bounds = array<i64: 1>, scalar_prefetch = 0 : i64, scratch_operands = 0 : i64, tpu.core_type = #tpu.core_type<tc>, window_params = [{transform_indices = @transform_0, window_bounds = array<i64: 8, 10>}, {pipeline_mode = #tpu.pipeline_mode<synchronous>, transform_indices = @transform_1, window_bounds = array<i64: 10, 128>}, {pipeline_mode = #tpu.pipeline_mode<synchronous>, transform_indices = @transform_2, window_bounds = array<i64: 1, 128>}, {pipeline_mode = #tpu.pipeline_mode<synchronous>, transform_indices = @transform_3, window_bounds = array<i64: 128, 128>}, {pipeline_mode = #tpu.pipeline_mode<synchronous>, transform_indices = @transform_4, window_bounds = array<i64: 1, 128>}, {pipeline_mode = #tpu.pipeline_mode<synchronous>, transform_indices = @transform_5, window_bounds = array<i64: 1, 128>}, {transform_indices = @transform_6, window_bounds = array<i64: 1>}, {transform_indices = @transform_7, window_bounds = array<i64: 1, 1, 8>}]} {
    %c0 = arith.constant 0 : index
    %c0_0 = arith.constant 0 : index
    %0 = vector.load %arg1[%c0, %c0_0] : memref<8x10xf32, #tpu.memory_space<vmem>>, vector<8x10xf32>
    %c0_1 = arith.constant 0 : index
    %c0_2 = arith.constant 0 : index
    %1 = vector.load %arg2[%c0_1, %c0_2] : memref<10x128xf32, #tpu.memory_space<vmem>>, vector<10x128xf32>
    %cst = arith.constant dense<0.000000e+00> : vector<8x128xf32>
    %2 = tpu.matmul %0, %1, %cst {dimension_numbers = #tpu.dot_dimension_numbers<[1], [0], [0], [1], [0, 0, 1, 1], [], []>} : vector<8x10xf32>, vector<10x128xf32>, vector<8x128xf32> -> vector<8x128xf32>
    %c0_3 = arith.constant 0 : index
    %c0_4 = arith.constant 0 : index
    %3 = vector.load %arg3[%c0_3, %c0_4] : memref<1x128xf32, #tpu.memory_space<vmem>>, vector<1x128xf32>
    %4 = vector.broadcast %3 : vector<1x128xf32> to vector<8x128xf32>
    %5 = arith.addf %2, %4 : vector<8x128xf32>
    %cst_5 = arith.constant 0.000000e+00 : f32
    %6 = vector.broadcast %cst_5 : f32 to vector<8x128xf32>
    %7 = arith.maximumf %5, %6 : vector<8x128xf32>
    %c0_6 = arith.constant 0 : index
    %c0_7 = arith.constant 0 : index
    %8 = vector.load %arg4[%c0_6, %c0_7] : memref<128x128xf32, #tpu.memory_space<vmem>>, vector<128x128xf32>
    %cst_8 = arith.constant dense<0.000000e+00> : vector<8x128xf32>
    %9 = tpu.matmul %7, %8, %cst_8 {dimension_numbers = #tpu.dot_dimension_numbers<[1], [0], [0], [1], [0, 0, 1, 1], [], []>} : vector<8x128xf32>, vector<128x128xf32>, vector<8x128xf32> -> vector<8x128xf32>
    %c0_9 = arith.constant 0 : index
    %c0_10 = arith.constant 0 : index
    %10 = vector.load %arg5[%c0_9, %c0_10] : memref<1x128xf32, #tpu.memory_space<vmem>>, vector<1x128xf32>
    %11 = vector.broadcast %10 : vector<1x128xf32> to vector<8x128xf32>
    %12 = arith.addf %9, %11 : vector<8x128xf32>
    %cst_11 = arith.constant 0.000000e+00 : f32
    %13 = vector.broadcast %cst_11 : f32 to vector<8x128xf32>
    %14 = arith.maximumf %12, %13 : vector<8x128xf32>
    %c0_12 = arith.constant 0 : index
    %c0_13 = arith.constant 0 : index
    %15 = vector.load %arg6[%c0_12, %c0_13] : memref<1x128xf32, #tpu.memory_space<vmem>>, vector<1x128xf32>
    %cst_14 = arith.constant dense<0.000000e+00> : vector<1x8xf32>
    %16 = tpu.matmul %15, %14, %cst_14 {dimension_numbers = #tpu.dot_dimension_numbers<[1], [1], [0], [0], [0, 0, 1, 0], [], []>} : vector<1x128xf32>, vector<8x128xf32>, vector<1x8xf32> -> vector<1x8xf32>
    %c0_15 = arith.constant 0 : index
    %17 = memref.load %arg7[%c0_15] : memref<1xf32, #tpu.memory_space<smem>>
    %18 = vector.broadcast %17 : f32 to vector<1x8xf32>
    %19 = arith.addf %16, %18 : vector<1x8xf32>
    %20 = vector.shape_cast %19 : vector<1x8xf32> to vector<1x1x8xf32>
    %c0_16 = arith.constant 0 : index
    %c0_17 = arith.constant 0 : index
    %c0_18 = arith.constant 0 : index
    %21 = vector.load %arg8[%c0_16, %c0_17, %c0_18] : memref<1x1x8xf32, #tpu.memory_space<vmem>>, vector<1x1x8xf32>
    tpu.vector_store %arg8[%c0_16, %c0_17, %c0_18], %20 {strides = array<i32>} : memref<1x1x8xf32, #tpu.memory_space<vmem>>, vector<1x1x8xf32>,
    return
  }
  func.func @transform_0(%arg0: i32) -> (i32, i32) {
    %c0_i32 = arith.constant 0 : i32
    %c0_i32_0 = arith.constant 0 : i32
    return %arg0, %c0_i32 : i32, i32
  }
  func.func @transform_1(%arg0: i32) -> (i32, i32) {
    %c0_i32 = arith.constant 0 : i32
    %c0_i32_0 = arith.constant 0 : i32
    %c0_i32_1 = arith.constant 0 : i32
    return %c0_i32, %c0_i32_0 : i32, i32
  }
  func.func @transform_2(%arg0: i32) -> (i32, i32) {
    %c0_i32 = arith.constant 0 : i32
    %c0_i32_0 = arith.constant 0 : i32
    %c0_i32_1 = arith.constant 0 : i32
    return %c0_i32, %c0_i32_0 : i32, i32
  }
  func.func @transform_3(%arg0: i32) -> (i32, i32) {
    %c0_i32 = arith.constant 0 : i32
    %c0_i32_0 = arith.constant 0 : i32
    %c0_i32_1 = arith.constant 0 : i32
    return %c0_i32, %c0_i32_0 : i32, i32
  }
  func.func @transform_4(%arg0: i32) -> (i32, i32) {
    %c0_i32 = arith.constant 0 : i32
    %c0_i32_0 = arith.constant 0 : i32
    %c0_i32_1 = arith.constant 0 : i32
    return %c0_i32, %c0_i32_0 : i32, i32
  }
  func.func @transform_5(%arg0: i32) -> (i32, i32) {
    %c0_i32 = arith.constant 0 : i32
    %c0_i32_0 = arith.constant 0 : i32
    %c0_i32_1 = arith.constant 0 : i32
    return %c0_i32, %c0_i32_0 : i32, i32
  }
  func.func @transform_6(%arg0: i32) -> i32 {
    %c0_i32 = arith.constant 0 : i32
    %c0_i32_0 = arith.constant 0 : i32
    return %c0_i32 : i32
  }
  func.func @transform_7(%arg0: i32) -> (i32, i32, i32) {
    %c0_i32 = arith.constant 0 : i32
    %c0_i32_0 = arith.constant 0 : i32
    %c0_i32_1 = arith.constant 0 : i32
    return %arg0, %c0_i32, %c0_i32_0 : i32, i32, i32
  }
}

</mosaic_0001>

<llo_original>
// kernel: simple_test_model_forward.1
$region0: #{simple_test_model_forward.1}
  #allocation0 [shape = 'u32[]', space=smem, size = 0x4, offset = 0x4, fixed_abs, tag = 'smem constant byte address 0x4 - core index']
  #allocation1 [shape = 'u32[144,128]{1,0:T(1,128)}', space=vmem, size = 0x12000, scoped, tag = 'internal scratch']
  #allocation2 [shape = 'f32[1]{0:T(128)S(6)}', space=smem, size = 0x200, scoped, tag = 'scoped memory for simple_test_model_forward.1']
  %s0 = inlined_call_operand.hbm [shape: f32[8,10], index: 0, kind: input, shape index: {}]
  %s1 = inlined_call_operand.hbm [shape: f32[10,128], index: 1, kind: input, shape index: {}]
  %s2 = inlined_call_operand.vmem [shape: f32[1,128], index: 2, kind: input, shape index: {}]
  %s3 = inlined_call_operand.hbm [shape: f32[128,128], index: 3, kind: input, shape index: {}]
  %s4 = inlined_call_operand.vmem [shape: f32[1,128], index: 4, kind: input, shape index: {}]
  %s5 = inlined_call_operand.vmem [shape: f32[1,128], index: 5, kind: input, shape index: {}]
  %s6 = inlined_call_operand.<no memory space> [shape: f32[1], index: 6, kind: input, shape index: {}]
  %s7 = inlined_call_operand.hbm [shape: f32[1,1,8], index: 7, kind: output, shape index: {}]
  %s8 = sld [smem:[#allocation0]]
  $region50: #{simple_test_model_forward.1} parent=0
    _
  %s10 = ssub.s32 1, %s8
  %s11 = scalar_select 0, %s10, %s8
  %12 = sst [smem:[#allocation2]] %s6
  $region1: #{simple_test_model_forward.1} parent=0
    #allocation3 [shape = 'u8[4096]{0}', space=vmem, size = 0x1000, scoped, tag = 'input window, operand 0, single buffered']
    #allocation4 [shape = 's32[1]{0}', space=sflag, size = 0x4, scoped, tag = 'scoped memory for simple_test_model_forward.1']
    #allocation5 [shape = 's32[1]{0}', space=sflag, size = 0x4, scoped, tag = 'scoped memory for simple_test_model_forward.1']
    #allocation6 [shape = 'u8[8192]{0}', space=vmem, size = 0x2000, scoped, tag = 'input window, operand 1, single buffered']
    #allocation7 [shape = 's32[1]{0}', space=sflag, size = 0x4, scoped, tag = 'scoped memory for simple_test_model_forward.1']
    #allocation8 [shape = 'u8[65536]{0}', space=vmem, size = 0x10000, scoped, tag = 'input window, operand 3, single buffered']
    #allocation9 [shape = 'u8[512]{0}', space=vmem, size = 0x400, scoped, tag = 'output window, operand 0, single buffered']
    %13 = vsyncpa [#allocation4], 0
    %14 = vsyncpa [#allocation7], 0
    %15 = vsyncpa [#allocation5], 0
    // Predicated region
    $region2: #{simple_test_model_forward.1} parent=1 // pred_check
      _
    $region3: #{simple_test_model_forward.1} parent=1 // pred_check_branch
      %17 = sbr.rel (0) target = $region5
    $region4: #{simple_test_model_forward.1} parent=1 // pred_region
      %s19 = ssub.s32 128, 128
      %20 = vsyncadd [#allocation4], %s19
      %s22 = sshll.u32 [#allocation3], 4
      %s23 = int_to_ptr.vmem [resolvable:$true] %s22
      %25 = dma.hbm_to_vmem [thread:$0]  %s0, 128, %s23, [#allocation4]
    $region5: #{simple_test_model_forward.1} parent=1 // pred_fallthru
      _
    // Predicated region
    $region6: #{simple_test_model_forward.1} parent=1 // pred_check
      _
    $region7: #{simple_test_model_forward.1} parent=1 // pred_check_branch
      %27 = sbr.rel (0) target = $region9
    $region8: #{simple_test_model_forward.1} parent=1 // pred_region
      %s29 = ssub.s32 256, 256
      %30 = vsyncadd [#allocation7], %s29
      %s31 = sshll.u32 [#allocation6], 4
      %s32 = int_to_ptr.vmem [resolvable:$true] %s31
      %37 = dma.hbm_to_vmem [thread:$0]  %s1, 256, %s32, [#allocation7], 128, 128, 8
    $region9: #{simple_test_model_forward.1} parent=1 // pred_fallthru
      _
    // Predicated region
    $region10: #{simple_test_model_forward.1} parent=1 // pred_check
      _
    $region11: #{simple_test_model_forward.1} parent=1 // pred_check_branch
      %39 = sbr.rel (0) target = $region13
    $region12: #{simple_test_model_forward.1} parent=1 // pred_region
      _
    $region13: #{simple_test_model_forward.1} parent=1 // pred_fallthru
      _
    // Predicated region
    $region14: #{simple_test_model_forward.1} parent=1 // pred_check
      _
    $region15: #{simple_test_model_forward.1} parent=1 // pred_check_branch
      %41 = sbr.rel (0) target = $region17
    $region16: #{simple_test_model_forward.1} parent=1 // pred_region
      %s43 = ssub.s32 2048, 2048
      %44 = vsyncadd [#allocation7], %s43
      %s45 = sshll.u32 [#allocation8], 4
      %s46 = int_to_ptr.vmem [resolvable:$true] %s45
      %51 = dma.hbm_to_vmem [thread:$0]  %s3, 2048, %s46, [#allocation7], 128, 128, 8
    $region17: #{simple_test_model_forward.1} parent=1 // pred_fallthru
      _
    // Predicated region
    $region18: #{simple_test_model_forward.1} parent=1 // pred_check
      _
    $region19: #{simple_test_model_forward.1} parent=1 // pred_check_branch
      %53 = sbr.rel (0) target = $region21
    $region20: #{simple_test_model_forward.1} parent=1 // pred_region
      _
    $region21: #{simple_test_model_forward.1} parent=1 // pred_fallthru
      _
    // Predicated region
    $region22: #{simple_test_model_forward.1} parent=1 // pred_check
      _
    $region23: #{simple_test_model_forward.1} parent=1 // pred_check_branch
      %55 = sbr.rel (0) target = $region25
    $region24: #{simple_test_model_forward.1} parent=1 // pred_region
      _
    $region25: #{simple_test_model_forward.1} parent=1 // pred_fallthru
      _
    // Predicated region
    $region26: #{simple_test_model_forward.1} parent=1 // pred_check
      _
    $region27: #{simple_test_model_forward.1} parent=1 // pred_check_branch
      %57 = sbr.rel (0) target = $region29
    $region28: #{simple_test_model_forward.1} parent=1 // pred_region
      _
    $region29: #{simple_test_model_forward.1} parent=1 // pred_fallthru
      _
    // Predicated region
    $region30: #{simple_test_model_forward.1} parent=1 // pred_check
      _
    $region31: #{simple_test_model_forward.1} parent=1 // pred_check_branch
      %59 = sbr.rel (0) target = $region33
    $region32: #{simple_test_model_forward.1} parent=1 // pred_region
      %60 = dma.done [#allocation4], 128
    $region33: #{simple_test_model_forward.1} parent=1 // pred_fallthru
      _
    // Predicated region
    $region34: #{simple_test_model_forward.1} parent=1 // pred_check
      _
    $region35: #{simple_test_model_forward.1} parent=1 // pred_check_branch
      %62 = sbr.rel (0) target = $region37
    $region36: #{simple_test_model_forward.1} parent=1 // pred_region
      %63 = dma.done [#allocation7], 256
    $region37: #{simple_test_model_forward.1} parent=1 // pred_fallthru
      _
    // Predicated region
    $region38: #{simple_test_model_forward.1} parent=1 // pred_check
      _
    $region39: #{simple_test_model_forward.1} parent=1 // pred_check_branch
      %65 = sbr.rel (0) target = $region41
    $region40: #{simple_test_model_forward.1} parent=1 // pred_region
      %66 = dma.done [#allocation7], 2048
    $region41: #{simple_test_model_forward.1} parent=1 // pred_fallthru
      _
    %v67 = vld [vmem:[#allocation3] sm:$0xff]
    %v68 = vld [vmem:[#allocation6] sm:$0xff]
    %v69 = vld [vmem:[#allocation6 + $0x8] sm:$0x3]
    %v70 = vld [vmem:[%s2] sm:$0x1]
    %v72 = vlaneseq
    %v73 = vshrl.u32 %v72, 7
    %v74 = vsub.s32 0, %v73
    %v75 = vrot.slane %v70, %v74
    %vm77 = vcmask 80896
    %v79 = vsel %vm77, %v67, 0
    %vm81 = vcmask 1041408
    %v83 = vsel %vm81, %v69, 0
    %85 = vmatprep.subr.mxu0 0.0
    %86 = vmatpush1.msra.mxu0 %v68
    %87 = vmatprep.subr.mxu0 0.0
    %88 = vmatpush1.msra.mxu0 %v83
    %89 = vmatprep.subr.mxu0 0.0
    %90 = vmatpush1.msra.mxu0 0.0
    %91 = vmatprep.subr.mxu0 0.0
    %92 = vmatpush1.msra.mxu0 0.0
    %93 = vmatprep.subr.mxu0 0.0
    %94 = vmatpush1.msra.mxu0 0.0
    %95 = vmatprep.subr.mxu0 0.0
    %96 = vmatpush1.msra.mxu0 0.0
    %97 = vmatprep.subr.mxu0 0.0
    %98 = vmatpush1.msra.mxu0 0.0
    %99 = vmatprep.subr.mxu0 0.0
    %100 = vmatpush1.msra.mxu0 0.0
    %101 = vmatprep.subr.mxu0 0.0
    %102 = vmatpush1.msra.mxu0 0.0
    %103 = vmatprep.subr.mxu0 0.0
    %104 = vmatpush1.msra.mxu0 0.0
    %105 = vmatprep.subr.mxu0 0.0
    %106 = vmatpush1.msra.mxu0 0.0
    %107 = vmatprep.subr.mxu0 0.0
    %108 = vmatpush1.msra.mxu0 0.0
    %109 = vmatprep.subr.mxu0 0.0
    %110 = vmatpush1.msra.mxu0 0.0
    %111 = vmatprep.subr.mxu0 0.0
    %112 = vmatpush1.msra.mxu0 0.0
    %113 = vmatprep.subr.mxu0 0.0
    %114 = vmatpush1.msra.mxu0 0.0
    %115 = vmatprep.subr.mxu0 0.0
    %116 = vmatpush1.msra.mxu0 0.0
    %117 = vmatprep.subr.mxu0 0.0
    %118 = vmatpush1.msra.mxu0 0.0
    %119 = vmatprep.subr.mxu0 0.0
    %120 = vmatpush1.msra.mxu0 0.0
    %121 = vmatprep.subr.mxu0 0.0
    %122 = vmatpush1.msra.mxu0 0.0
    %123 = vmatprep.subr.mxu0 0.0
    %124 = vmatpush1.msra.mxu0 0.0
    %125 = vmatprep.subr.mxu0 0.0
    %126 = vmatpush1.msra.mxu0 0.0
    %127 = vmatprep.subr.mxu0 0.0
    %128 = vmatpush1.msra.mxu0 0.0
    %129 = vmatprep.subr.mxu0 0.0
    %130 = vmatpush1.msra.mxu0 0.0
    %131 = vmatprep.subr.mxu0 0.0
    %132 = vmatpush1.msra.mxu0 0.0
    %133 = vmatprep.subr.mxu0 0.0
    %134 = vmatpush1.msra.mxu0 0.0
    %135 = vmatprep.subr.mxu0 0.0
    %136 = vmatpush1.msra.mxu0 0.0
    %137 = vmatprep.subr.mxu0 0.0
    %138 = vmatpush1.msra.mxu0 0.0
    %139 = vmatprep.subr.mxu0 0.0
    %140 = vmatpush1.msra.mxu0 0.0
    %141 = vmatprep.subr.mxu0 0.0
    %142 = vmatpush1.msra.mxu0 0.0
    %143 = vmatprep.subr.mxu0 0.0
    %144 = vmatpush1.msra.mxu0 0.0
    %145 = vmatprep.subr.mxu0 0.0
    %146 = vmatpush1.msra.mxu0 0.0
    %147 = vmatprep.subr.mxu0 0.0
    %148 = vmatpush1.msra.mxu0 0.0
    %149 = vmatprep.mubr.f32.mxu0 0.0
    %150 = vmatmul.mubr.f32.gmra.mrb[0].mxu0 %v79
    %v151 = vpop.f32.mrb[0].mxu0
    %v152 = vadd.f32 %v75, %v151
    %v153 = vpop.f32.mrb[0].mxu0
    %154 = vdwg.mxu0
    %v155 = vmax.f32 %v152, 0.0
    %v156 = vld [vmem:[#allocation8] sm:$0xff]
    %v157 = vld [vmem:[#allocation8 + $0x8] sm:$0xff]
    %v158 = vld [vmem:[#allocation8 + $0x10] sm:$0xff]
    %v159 = vld [vmem:[#allocation8 + $0x18] sm:$0xff]
    %v160 = vld [vmem:[#allocation8 + $0x20] sm:$0xff]
    %v161 = vld [vmem:[#allocation8 + $0x28] sm:$0xff]
    %v162 = vld [vmem:[#allocation8 + $0x30] sm:$0xff]
    %v163 = vld [vmem:[#allocation8 + $0x38] sm:$0xff]
    %v164 = vld [vmem:[#allocation8 + $0x40] sm:$0xff]
    %v165 = vld [vmem:[#allocation8 + $0x48] sm:$0xff]
    %v166 = vld [vmem:[#allocation8 + $0x50] sm:$0xff]
    %v167 = vld [vmem:[#allocation8 + $0x58] sm:$0xff]
    %v168 = vld [vmem:[#allocation8 + $0x60] sm:$0xff]
    %v169 = vld [vmem:[#allocation8 + $0x68] sm:$0xff]
    %v170 = vld [vmem:[#allocation8 + $0x70] sm:$0xff]
    %v171 = vld [vmem:[#allocation8 + $0x78] sm:$0xff]
    %v172 = vld [vmem:[%s4] sm:$0x1]
    %v174 = vlaneseq
    %v175 = vshrl.u32 %v174, 7
    %v176 = vsub.s32 0, %v175
    %v177 = vrot.slane %v172, %v176
    %179 = vmatprep.subr.mxu0 0.0
    %180 = vmatpush1.msra.mxu0 %v156
    %181 = vmatprep.subr.mxu0 0.0
    %182 = vmatpush1.msra.mxu0 %v157
    %183 = vmatprep.subr.mxu0 0.0
    %184 = vmatpush1.msra.mxu0 %v158
    %185 = vmatprep.subr.mxu0 0.0
    %186 = vmatpush1.msra.mxu0 %v159
    %187 = vmatprep.subr.mxu0 0.0
    %188 = vmatpush1.msra.mxu0 %v160
    %189 = vmatprep.subr.mxu0 0.0
    %190 = vmatpush1.msra.mxu0 %v161
    %191 = vmatprep.subr.mxu0 0.0
    %192 = vmatpush1.msra.mxu0 %v162
    %193 = vmatprep.subr.mxu0 0.0
    %194 = vmatpush1.msra.mxu0 %v163
    %195 = vmatprep.subr.mxu0 0.0
    %196 = vmatpush1.msra.mxu0 %v164
    %197 = vmatprep.subr.mxu0 0.0
    %198 = vmatpush1.msra.mxu0 %v165
    %199 = vmatprep.subr.mxu0 0.0
    %200 = vmatpush1.msra.mxu0 %v166
    %201 = vmatprep.subr.mxu0 0.0
    %202 = vmatpush1.msra.mxu0 %v167
    %203 = vmatprep.subr.mxu0 0.0
    %204 = vmatpush1.msra.mxu0 %v168
    %205 = vmatprep.subr.mxu0 0.0
    %206 = vmatpush1.msra.mxu0 %v169
    %207 = vmatprep.subr.mxu0 0.0
    %208 = vmatpush1.msra.mxu0 %v170
    %209 = vmatprep.subr.mxu0 0.0
    %210 = vmatpush1.msra.mxu0 %v171
    %211 = vmatprep.subr.mxu0 0.0
    %212 = vmatpush1.msra.mxu0 0.0
    %213 = vmatprep.subr.mxu0 0.0
    %214 = vmatpush1.msra.mxu0 0.0
    %215 = vmatprep.subr.mxu0 0.0
    %216 = vmatpush1.msra.mxu0 0.0
    %217 = vmatprep.subr.mxu0 0.0
    %218 = vmatpush1.msra.mxu0 0.0
    %219 = vmatprep.subr.mxu0 0.0
    %220 = vmatpush1.msra.mxu0 0.0
    %221 = vmatprep.subr.mxu0 0.0
    %222 = vmatpush1.msra.mxu0 0.0
    %223 = vmatprep.subr.mxu0 0.0
    %224 = vmatpush1.msra.mxu0 0.0
    %225 = vmatprep.subr.mxu0 0.0
    %226 = vmatpush1.msra.mxu0 0.0
    %227 = vmatprep.subr.mxu0 0.0
    %228 = vmatpush1.msra.mxu0 0.0
    %229 = vmatprep.subr.mxu0 0.0
    %230 = vmatpush1.msra.mxu0 0.0
    %231 = vmatprep.subr.mxu0 0.0
    %232 = vmatpush1.msra.mxu0 0.0
    %233 = vmatprep.subr.mxu0 0.0
    %234 = vmatpush1.msra.mxu0 0.0
    %235 = vmatprep.subr.mxu0 0.0
    %236 = vmatpush1.msra.mxu0 0.0
    %237 = vmatprep.subr.mxu0 0.0
    %238 = vmatpush1.msra.mxu0 0.0
    %239 = vmatprep.subr.mxu0 0.0
    %240 = vmatpush1.msra.mxu0 0.0
    %241 = vmatprep.subr.mxu0 0.0
    %242 = vmatpush1.msra.mxu0 0.0
    %243 = vmatprep.mubr.f32.mxu0 0.0
    %244 = vmatmul.mubr.f32.gmra.mrb[0].mxu0 %v155
    %v245 = vpop.f32.mrb[0].mxu0
    %v246 = vadd.f32 %v177, %v245
    %v247 = vpop.f32.mrb[0].mxu0
    %248 = vdwg.mxu0
    %v249 = vmax.f32 %v246, 0.0
    %v250 = vld [vmem:[%s5] sm:$0x1]
    %s251 = sld [smem:[#allocation2]]
    %v252 = vstv %s251
    %253 = vmatprep.subr.mxu0 0.0
    %254 = vmatpush1.xpose.msra.mxu0 %v249
    %255 = vmatprep.subr.mxu0 0.0
    %256 = vmatpush1.xpose.msra.mxu0 0.0
    %257 = vmatprep.subr.mxu0 0.0
    %258 = vmatpush1.xpose.msra.mxu0 0.0
    %259 = vmatprep.subr.mxu0 0.0
    %260 = vmatpush1.xpose.msra.mxu0 0.0
    %261 = vmatprep.subr.mxu0 0.0
    %262 = vmatpush1.xpose.msra.mxu0 0.0
    %263 = vmatprep.subr.mxu0 0.0
    %264 = vmatpush1.xpose.msra.mxu0 0.0
    %265 = vmatprep.subr.mxu0 0.0
    %266 = vmatpush1.xpose.msra.mxu0 0.0
    %267 = vmatprep.subr.mxu0 0.0
    %268 = vmatpush1.xpose.msra.mxu0 0.0
    %269 = vmatprep.subr.mxu0 0.0
    %270 = vmatpush1.xpose.msra.mxu0 0.0
    %271 = vmatprep.subr.mxu0 0.0
    %272 = vmatpush1.xpose.msra.mxu0 0.0
    %273 = vmatprep.subr.mxu0 0.0
    %274 = vmatpush1.xpose.msra.mxu0 0.0
    %275 = vmatprep.subr.mxu0 0.0
    %276 = vmatpush1.xpose.msra.mxu0 0.0
    %277 = vmatprep.subr.mxu0 0.0
    %278 = vmatpush1.xpose.msra.mxu0 0.0
    %279 = vmatprep.subr.mxu0 0.0
    %280 = vmatpush1.xpose.msra.mxu0 0.0
    %281 = vmatprep.subr.mxu0 0.0
    %282 = vmatpush1.xpose.msra.mxu0 0.0
    %283 = vmatprep.subr.mxu0 0.0
    %284 = vmatpush1.xpose.msra.mxu0 0.0
    %285 = vmatprep.subr.mxu0 0.0
    %286 = vmatpush1.xpose.msra.mxu0 0.0
    %287 = vmatprep.subr.mxu0 0.0
    %288 = vmatpush1.xpose.msra.mxu0 0.0
    %289 = vmatprep.subr.mxu0 0.0
    %290 = vmatpush1.xpose.msra.mxu0 0.0
    %291 = vmatprep.subr.mxu0 0.0
    %292 = vmatpush1.xpose.msra.mxu0 0.0
    %293 = vmatprep.subr.mxu0 0.0
    %294 = vmatpush1.xpose.msra.mxu0 0.0
    %295 = vmatprep.subr.mxu0 0.0
    %296 = vmatpush1.xpose.msra.mxu0 0.0
    %297 = vmatprep.subr.mxu0 0.0
    %298 = vmatpush1.xpose.msra.mxu0 0.0
    %299 = vmatprep.subr.mxu0 0.0
    %300 = vmatpush1.xpose.msra.mxu0 0.0
    %301 = vmatprep.subr.mxu0 0.0
    %302 = vmatpush1.xpose.msra.mxu0 0.0
    %303 = vmatprep.subr.mxu0 0.0
    %304 = vmatpush1.xpose.msra.mxu0 0.0
    %305 = vmatprep.subr.mxu0 0.0
    %306 = vmatpush1.xpose.msra.mxu0 0.0
    %307 = vmatprep.subr.mxu0 0.0
    %308 = vmatpush1.xpose.msra.mxu0 0.0
    %309 = vmatprep.subr.mxu0 0.0
    %310 = vmatpush1.xpose.msra.mxu0 0.0
    %311 = vmatprep.subr.mxu0 0.0
    %312 = vmatpush1.xpose.msra.mxu0 0.0
    %313 = vmatprep.subr.mxu0 0.0
    %314 = vmatpush1.xpose.msra.mxu0 0.0
    %315 = vmatprep.subr.mxu0 0.0
    %316 = vmatpush1.xpose.msra.mxu0 0.0
    %317 = vmatprep.mubr.f32.mxu0 0.0
    %318 = vmatmul.mubr.f32.gmra.mrb[0].mxu0 %v250
    %v319 = vpop.f32.mrb[0].mxu0
    %v320 = vadd.f32 %v252, %v319
    %v321 = vpop.f32.mrb[0].mxu0
    %322 = vdwg.mxu0
    %vm323 = vcmask 57344
    %324 = vst.msk [vmem:[#allocation9] sm:$0x1] %vm323, %v320
    // Predicated region
    $region42: #{simple_test_model_forward.1} parent=1 // pred_check
      _
    $region43: #{simple_test_model_forward.1} parent=1 // pred_check_branch
      %326 = sbr.rel (0) target = $region45
    $region44: #{simple_test_model_forward.1} parent=1 // pred_region
      %s328 = ssub.s32 16, 16
      %329 = vsyncadd [#allocation5], %s328
      %s331 = sshll.u32 [#allocation9], 4
      %s332 = int_to_ptr.vmem [resolvable:$true] %s331
      %334 = dma.vmem_to_hbm [thread:$0]  %s332, 16, %s7, [#allocation5]
    $region45: #{simple_test_model_forward.1} parent=1 // pred_fallthru
      _
    // Predicated region
    $region46: #{simple_test_model_forward.1} parent=1 // pred_check
      _
    $region47: #{simple_test_model_forward.1} parent=1 // pred_check_branch
      %336 = sbr.rel (0) target = $region49
    $region48: #{simple_test_model_forward.1} parent=1 // pred_region
      %337 = dma.done [#allocation5], 16
    $region49: #{simple_test_model_forward.1} parent=1 // pred_fallthru
      _
    %338 = vsyncpa [#allocation4], 1
    %339 = vsyncpa [#allocation7], 1
    %340 = vsyncpa [#allocation5], 1

</llo_original>
